<compile_context>
chip_gen: v7x
topology: tpu7x:2x2x1
jax: 0.10.0
libtpu: 0.0.40
codegen_flags: <defaults>
</compile_context>

<pallas_src>
import jax
import jax.numpy as jnp
from jax.experimental import pallas as pl
from jax.experimental.pallas import tpu as pltpu

Z = 32
H1 = 128
H2 = 256
OUT = 28 * 28          # 784
OUT_PAD = 896          # 7 * 128 -> lane-dense stores / MXU-friendly N


def decoder_kernel(x_ref, w1_ref, b1_ref, w2_ref, b2_ref, w3_ref, b3_ref, o_ref):
    # Fused 3-layer MLP on one batch tile. bf16 MXU operands, f32 accumulate/epilogue.
    x = x_ref[...].astype(jnp.bfloat16)                                          # (TB, Z)
    h1 = jnp.dot(x, w1_ref[...], preferred_element_type=jnp.float32)             # (TB, H1)
    h1 = jnp.maximum(h1 + b1_ref[...], 0.0)
    h2 = jnp.dot(h1.astype(jnp.bfloat16), w2_ref[...],
                 preferred_element_type=jnp.float32)                             # (TB, H2)
    h2 = jnp.maximum(h2 + b2_ref[...], 0.0)
    o = jnp.dot(h2.astype(jnp.bfloat16), w3_ref[...],
                preferred_element_type=jnp.float32)                              # (TB, OUT_PAD)
    o_ref[...] = (o + b3_ref[...]).astype(o_ref.dtype)


def prepare_params(params):
    """One-time prep: cast weights to bf16 and lane-pad layer 3 from 784 -> 896 (zeros)."""
    w1, b1, w2, b2, w3, b3 = params
    pad = OUT_PAD - OUT
    w3p = jnp.pad(w3, ((0, 0), (0, pad))).astype(jnp.bfloat16)
    b3p = jnp.pad(b3, ((0, 0), (0, pad)))
    return (w1.astype(jnp.bfloat16), b1,
            w2.astype(jnp.bfloat16), b2,
            w3p, b3p)


def decoder_forward(sample, prep_params):
    """sample: (B, Z) f32 -> (B, 1, 28, 28) f32 (matches PyTorch .view(-1,1,28,28))."""
    w1, b1, w2, b2, w3p, b3p = prep_params
    B = sample.shape[0]

    # Batch tile: 256 rows for throughput-sized batches (full MXU M on v6e/v7x,
    # 2x128 passes on v5e); tiny batches round up to a sublane multiple, single step.
    TB = 256 if B >= 256 else max(8, ((B + 7) // 8) * 8)
    B_pad = pl.cdiv(B, TB) * TB
    x = sample if B_pad == B else jnp.pad(sample, ((0, B_pad - B), (0, 0)))

    out_padded = pl.pallas_call(
        decoder_kernel,
        out_shape=jax.ShapeDtypeStruct((B_pad, OUT_PAD), jnp.float32),
        grid_spec=pltpu.PrefetchScalarGridSpec(
            num_scalar_prefetch=0,
            grid=(B_pad // TB,),
            in_specs=[
                pl.BlockSpec((TB, Z), lambda i: (i, 0)),        # x: streamed per tile
                pl.BlockSpec((Z, H1), lambda i: (0, 0)),        # weights/biases: resident
                pl.BlockSpec((1, H1), lambda i: (0, 0)),
                pl.BlockSpec((H1, H2), lambda i: (0, 0)),
                pl.BlockSpec((1, H2), lambda i: (0, 0)),
                pl.BlockSpec((H2, OUT_PAD), lambda i: (0, 0)),
                pl.BlockSpec((1, OUT_PAD), lambda i: (0, 0)),
            ],
            out_specs=pl.BlockSpec((TB, OUT_PAD), lambda i: (i, 0)),
        ),
        compiler_params=pltpu.CompilerParams(
            dimension_semantics=("parallel",),   # shard batch tiles across TCs on v7x
        ),
    )(x, w1, b1, w2, b2, w3p, b3p)

    # Drop batch padding and the 112 zero lanes, then NCHW view.
    return out_padded[:B, :OUT].reshape(B, 1, 28, 28)


def init_params(key):
    """Deterministic init mirroring nn.Linear(z,128), nn.Linear(128,256), nn.Linear(256,784).
    Weights stored as (in, out) = transpose of torch's (out, in)."""
    ks = jax.random.split(key, 6)

    def uniform_fan_in(k, shape, fan_in):
        bound = 1.0 / jnp.sqrt(fan_in)
        return jax.random.uniform(k, shape, jnp.float32, -bound, bound)

    w1 = uniform_fan_in(ks[0], (Z, H1), Z)
    b1 = uniform_fan_in(ks[1], (1, H1), Z)
    w2 = uniform_fan_in(ks[2], (H1, H2), H1)
    b2 = uniform_fan_in(ks[3], (1, H2), H1)
    w3 = uniform_fan_in(ks[4], (H2, OUT), H2)
    b3 = uniform_fan_in(ks[5], (1, OUT), H2)
    return (w1, b1, w2, b2, w3, b3)


def reference_forward_f32(sample, params):
    """Pure f32 reference (exact PyTorch semantics)."""
    w1, b1, w2, b2, w3, b3 = params
    h1 = jnp.maximum(sample @ w1 + b1, 0.0)
    h2 = jnp.maximum(h1 @ w2 + b2, 0.0)
    o = h2 @ w3 + b3
    return o.reshape(-1, 1, 28, 28)


def reference_forward_bf16(sample, params):
    """Reference mirroring the kernel numerics: bf16 operands, f32 accumulate."""
    w1, b1, w2, b2, w3, b3 = params
    bf = jnp.bfloat16
    h1 = jnp.dot(sample.astype(bf), w1.astype(bf), preferred_element_type=jnp.float32) + b1
    h1 = jnp.maximum(h1, 0.0)
    h2 = jnp.dot(h1.astype(bf), w2.astype(bf), preferred_element_type=jnp.float32) + b2
    h2 = jnp.maximum(h2, 0.0)
    o = jnp.dot(h2.astype(bf), w3.astype(bf), preferred_element_type=jnp.float32) + b3
    return o.reshape(-1, 1, 28, 28)


if __name__ == "__main__":
    key = jax.random.PRNGKey(0)
    k_param, k_sample = jax.random.split(key)

    params = init_params(k_param)
    prep = prepare_params(params)

    B = 8
    sample = jax.random.normal(k_sample, (B, Z), dtype=jnp.float32)

    out = decoder_forward(sample, prep)
    out = jax.block_until_ready(out)

    assert out.shape == (B, 1, 28, 28), out.shape

    # Tight check against a reference with matching bf16/f32-acc numerics.
    ref_bf16 = reference_forward_bf16(sample, params)
    assert jnp.allclose(out, ref_bf16, atol=1e-3, rtol=1e-3), float(
        jnp.max(jnp.abs(out - ref_bf16)))

    # Loose semantic sanity check against the pure-f32 PyTorch-equivalent reference.
    ref_f32 = reference_forward_f32(sample, params)
    assert jnp.allclose(out, ref_f32, atol=1e-1, rtol=1e-1), float(
        jnp.max(jnp.abs(out - ref_f32)))

    print("KERNEL_OK")
</pallas_src>

<mosaic_0001>
module attributes {stable_mosaic.version = 11 : i64} {
  func.func @decoder_kernel(%arg0: i32, %arg1: memref<8x32xf32, #tpu.memory_space<vmem>>, %arg2: memref<32x128xbf16, #tpu.memory_space<vmem>>, %arg3: memref<1x128xf32, #tpu.memory_space<vmem>>, %arg4: memref<128x256xbf16, #tpu.memory_space<vmem>>, %arg5: memref<1x256xf32, #tpu.memory_space<vmem>>, %arg6: memref<256x896xbf16, #tpu.memory_space<vmem>>, %arg7: memref<1x896xf32, #tpu.memory_space<vmem>>, %arg8: memref<8x896xf32, #tpu.memory_space<vmem>>) attributes {dimension_semantics = [#tpu.dimension_semantics<parallel>], iteration_bounds = array<i64: 1>, scalar_prefetch = 0 : i64, scratch_operands = 0 : i64, tpu.core_type = #tpu.core_type<tc>, window_params = [{transform_indices = @transform_0, window_bounds = array<i64: 8, 32>}, {pipeline_mode = #tpu.pipeline_mode<synchronous>, transform_indices = @transform_1, window_bounds = array<i64: 32, 128>}, {pipeline_mode = #tpu.pipeline_mode<synchronous>, transform_indices = @transform_2, window_bounds = array<i64: 1, 128>}, {pipeline_mode = #tpu.pipeline_mode<synchronous>, transform_indices = @transform_3, window_bounds = array<i64: 128, 256>}, {pipeline_mode = #tpu.pipeline_mode<synchronous>, transform_indices = @transform_4, window_bounds = array<i64: 1, 256>}, {pipeline_mode = #tpu.pipeline_mode<synchronous>, transform_indices = @transform_5, window_bounds = array<i64: 256, 896>}, {pipeline_mode = #tpu.pipeline_mode<synchronous>, transform_indices = @transform_6, window_bounds = array<i64: 1, 896>}, {transform_indices = @transform_7, window_bounds = array<i64: 8, 896>}]} {
    %c0 = arith.constant 0 : index
    %c0_0 = arith.constant 0 : index
    %0 = vector.load %arg1[%c0, %c0_0] : memref<8x32xf32, #tpu.memory_space<vmem>>, vector<8x32xf32>
    %1 = arith.truncf %0 : vector<8x32xf32> to vector<8x32xbf16>
    %c0_1 = arith.constant 0 : index
    %c0_2 = arith.constant 0 : index
    %2 = vector.load %arg2[%c0_1, %c0_2] : memref<32x128xbf16, #tpu.memory_space<vmem>>, vector<32x128xbf16>
    %cst = arith.constant dense<0.000000e+00> : vector<8x128xf32>
    %3 = tpu.matmul %1, %2, %cst {dimension_numbers = #tpu.dot_dimension_numbers<[1], [0], [0], [1], [0, 0, 1, 1], [], []>} : vector<8x32xbf16>, vector<32x128xbf16>, vector<8x128xf32> -> vector<8x128xf32>
    %c0_3 = arith.constant 0 : index
    %c0_4 = arith.constant 0 : index
    %4 = vector.load %arg3[%c0_3, %c0_4] : memref<1x128xf32, #tpu.memory_space<vmem>>, vector<1x128xf32>
    %5 = vector.broadcast %4 : vector<1x128xf32> to vector<8x128xf32>
    %6 = arith.addf %3, %5 : vector<8x128xf32>
    %cst_5 = arith.constant 0.000000e+00 : f32
    %7 = vector.broadcast %cst_5 : f32 to vector<8x128xf32>
    %8 = arith.maximumf %6, %7 : vector<8x128xf32>
    %9 = arith.truncf %8 : vector<8x128xf32> to vector<8x128xbf16>
    %c0_6 = arith.constant 0 : index
    %c0_7 = arith.constant 0 : index
    %10 = vector.load %arg4[%c0_6, %c0_7] : memref<128x256xbf16, #tpu.memory_space<vmem>>, vector<128x256xbf16>
    %cst_8 = arith.constant dense<0.000000e+00> : vector<8x256xf32>
    %11 = tpu.matmul %9, %10, %cst_8 {dimension_numbers = #tpu.dot_dimension_numbers<[1], [0], [0], [1], [0, 0, 1, 1], [], []>} : vector<8x128xbf16>, vector<128x256xbf16>, vector<8x256xf32> -> vector<8x256xf32>
    %c0_9 = arith.constant 0 : index
    %c0_10 = arith.constant 0 : index
    %12 = vector.load %arg5[%c0_9, %c0_10] : memref<1x256xf32, #tpu.memory_space<vmem>>, vector<1x256xf32>
    %13 = vector.broadcast %12 : vector<1x256xf32> to vector<8x256xf32>
    %14 = arith.addf %11, %13 : vector<8x256xf32>
    %cst_11 = arith.constant 0.000000e+00 : f32
    %15 = vector.broadcast %cst_11 : f32 to vector<8x256xf32>
    %16 = arith.maximumf %14, %15 : vector<8x256xf32>
    %17 = arith.truncf %16 : vector<8x256xf32> to vector<8x256xbf16>
    %c0_12 = arith.constant 0 : index
    %c0_13 = arith.constant 0 : index
    %18 = vector.load %arg6[%c0_12, %c0_13] : memref<256x896xbf16, #tpu.memory_space<vmem>>, vector<256x896xbf16>
    %cst_14 = arith.constant dense<0.000000e+00> : vector<8x896xf32>
    %19 = tpu.matmul %17, %18, %cst_14 {dimension_numbers = #tpu.dot_dimension_numbers<[1], [0], [0], [1], [0, 0, 1, 1], [], []>} : vector<8x256xbf16>, vector<256x896xbf16>, vector<8x896xf32> -> vector<8x896xf32>
    %c0_15 = arith.constant 0 : index
    %c0_16 = arith.constant 0 : index
    %20 = vector.load %arg7[%c0_15, %c0_16] : memref<1x896xf32, #tpu.memory_space<vmem>>, vector<1x896xf32>
    %21 = vector.broadcast %20 : vector<1x896xf32> to vector<8x896xf32>
    %22 = arith.addf %19, %21 : vector<8x896xf32>
    %c0_17 = arith.constant 0 : index
    %c0_18 = arith.constant 0 : index
    %23 = vector.load %arg8[%c0_17, %c0_18] : memref<8x896xf32, #tpu.memory_space<vmem>>, vector<8x896xf32>
    tpu.vector_store %arg8[%c0_17, %c0_18], %22 {strides = array<i32>} : memref<8x896xf32, #tpu.memory_space<vmem>>, vector<8x896xf32>,
    return
  }
  func.func @transform_0(%arg0: i32) -> (i32, i32) {
    %c0_i32 = arith.constant 0 : i32
    %c0_i32_0 = arith.constant 0 : i32
    return %arg0, %c0_i32 : i32, i32
  }
  func.func @transform_1(%arg0: i32) -> (i32, i32) {
    %c0_i32 = arith.constant 0 : i32
    %c0_i32_0 = arith.constant 0 : i32
    %c0_i32_1 = arith.constant 0 : i32
    return %c0_i32, %c0_i32_0 : i32, i32
  }
  func.func @transform_2(%arg0: i32) -> (i32, i32) {
    %c0_i32 = arith.constant 0 : i32
    %c0_i32_0 = arith.constant 0 : i32
    %c0_i32_1 = arith.constant 0 : i32
    return %c0_i32, %c0_i32_0 : i32, i32
  }
  func.func @transform_3(%arg0: i32) -> (i32, i32) {
    %c0_i32 = arith.constant 0 : i32
    %c0_i32_0 = arith.constant 0 : i32
    %c0_i32_1 = arith.constant 0 : i32
    return %c0_i32, %c0_i32_0 : i32, i32
  }
  func.func @transform_4(%arg0: i32) -> (i32, i32) {
    %c0_i32 = arith.constant 0 : i32
    %c0_i32_0 = arith.constant 0 : i32
    %c0_i32_1 = arith.constant 0 : i32
    return %c0_i32, %c0_i32_0 : i32, i32
  }
  func.func @transform_5(%arg0: i32) -> (i32, i32) {
    %c0_i32 = arith.constant 0 : i32
    %c0_i32_0 = arith.constant 0 : i32
    %c0_i32_1 = arith.constant 0 : i32
    return %c0_i32, %c0_i32_0 : i32, i32
  }
  func.func @transform_6(%arg0: i32) -> (i32, i32) {
    %c0_i32 = arith.constant 0 : i32
    %c0_i32_0 = arith.constant 0 : i32
    %c0_i32_1 = arith.constant 0 : i32
    return %c0_i32, %c0_i32_0 : i32, i32
  }
  func.func @transform_7(%arg0: i32) -> (i32, i32) {
    %c0_i32 = arith.constant 0 : i32
    %c0_i32_0 = arith.constant 0 : i32
    return %arg0, %c0_i32 : i32, i32
  }
}

</mosaic_0001>

<llo_original>
// kernel: tpu_custom_call.1
$region0: #{tpu_custom_call.1}
  #allocation0 [shape = 'u32[]', space=smem, size = 0x4, offset = 0x4, fixed_abs, tag = 'smem constant byte address 0x4 - core index']
  #allocation1 [shape = 'u32[144,128]{1,0:T(1,128)}', space=vmem, size = 0x12000, scoped, tag = 'internal scratch']
  %s0 = inlined_call_operand.hbm [shape: f32[8,32], index: 0, kind: input, shape index: {}]
  %s1 = inlined_call_operand.hbm [shape: bf16[32,128], index: 1, kind: input, shape index: {}]
  %s2 = inlined_call_operand.vmem [shape: f32[1,128], index: 2, kind: input, shape index: {}]
  %s3 = inlined_call_operand.hbm [shape: bf16[128,256], index: 3, kind: input, shape index: {}]
  %s4 = inlined_call_operand.vmem [shape: f32[1,256], index: 4, kind: input, shape index: {}]
  %s5 = inlined_call_operand.hbm [shape: bf16[256,896], index: 5, kind: input, shape index: {}]
  %s6 = inlined_call_operand.vmem [shape: f32[1,896], index: 6, kind: input, shape index: {}]
  %s7 = inlined_call_operand.hbm [shape: f32[8,896], index: 7, kind: output, shape index: {}]
  %s8 = sld [smem:[#allocation0]]
  $region54: #{tpu_custom_call.1} parent=0
    _
  %s10 = ssub.s32 1, %s8
  %s11 = scalar_select 0, %s10, %s8
  $region1: #{tpu_custom_call.1} parent=0
    #allocation2 [shape = 'u8[4096]{0}', space=vmem, size = 0x1000, scoped, tag = 'input window, operand 0, single buffered']
    #allocation3 [shape = 's32[1]{0}', space=sflag, size = 0x4, scoped, tag = 'scoped memory for tpu_custom_call.1']
    #allocation4 [shape = 's32[1]{0}', space=sflag, size = 0x4, scoped, tag = 'scoped memory for tpu_custom_call.1']
    #allocation5 [shape = 'u8[8192]{0}', space=vmem, size = 0x2000, scoped, tag = 'input window, operand 1, single buffered']
    #allocation6 [shape = 's32[1]{0}', space=sflag, size = 0x4, scoped, tag = 'scoped memory for tpu_custom_call.1']
    #allocation7 [shape = 'u8[65536]{0}', space=vmem, size = 0x10000, scoped, tag = 'input window, operand 3, single buffered']
    #allocation8 [shape = 'u8[458752]{0}', space=vmem, size = 0x70000, scoped, tag = 'input window, operand 5, single buffered']
    #allocation9 [shape = 's32[1]{0}', space=sflag, size = 0x4, scoped, tag = 'scoped memory for tpu_custom_call.1']
    #allocation10 [shape = 'u8[28672]{0}', space=vmem, size = 0x7000, scoped, tag = 'output window, operand 0, single buffered']
    %12 = vsyncpa [#allocation3], 0
    %13 = vsyncpa [#allocation6], 0
    %14 = vsyncpa [#allocation9], 0
    %15 = vsyncpa [#allocation4], 0
    // Predicated region
    $region2: #{tpu_custom_call.1} parent=1 // pred_check
      _
    $region3: #{tpu_custom_call.1} parent=1 // pred_check_branch
      %17 = sbr.rel (0) target = $region5
    $region4: #{tpu_custom_call.1} parent=1 // pred_region
      %s19 = ssub.s32 128, 128
      %20 = vsyncadd [#allocation3], %s19
      %s22 = sshll.u32 [#allocation2], 4
      %s23 = int_to_ptr.vmem [resolvable:$true] %s22
      %25 = dma.hbm_to_vmem [thread:$0]  %s0, 128, %s23, [#allocation3]
    $region5: #{tpu_custom_call.1} parent=1 // pred_fallthru
      _
    // Predicated region
    $region6: #{tpu_custom_call.1} parent=1 // pred_check
      _
    $region7: #{tpu_custom_call.1} parent=1 // pred_check_branch
      %27 = sbr.rel (0) target = $region9
    $region8: #{tpu_custom_call.1} parent=1 // pred_region
      %s29 = ssub.s32 256, 256
      %30 = vsyncadd [#allocation6], %s29
      %s31 = sshll.u32 [#allocation5], 4
      %s32 = int_to_ptr.vmem [resolvable:$true] %s31
      %37 = dma.hbm_to_vmem [thread:$0]  %s1, 256, %s32, [#allocation6], 64, 64, 4
    $region9: #{tpu_custom_call.1} parent=1 // pred_fallthru
      _
    // Predicated region
    $region10: #{tpu_custom_call.1} parent=1 // pred_check
      _
    $region11: #{tpu_custom_call.1} parent=1 // pred_check_branch
      %39 = sbr.rel (0) target = $region13
    $region12: #{tpu_custom_call.1} parent=1 // pred_region
      _
    $region13: #{tpu_custom_call.1} parent=1 // pred_fallthru
      _
    // Predicated region
    $region14: #{tpu_custom_call.1} parent=1 // pred_check
      _
    $region15: #{tpu_custom_call.1} parent=1 // pred_check_branch
      %41 = sbr.rel (0) target = $region17
    $region16: #{tpu_custom_call.1} parent=1 // pred_region
      %s43 = ssub.s32 2048, 2048
      %44 = vsyncadd [#allocation6], %s43
      %s45 = sshll.u32 [#allocation7], 4
      %s46 = int_to_ptr.vmem [resolvable:$true] %s45
      %51 = dma.hbm_to_vmem [thread:$0]  %s3, 2048, %s46, [#allocation6], 128, 128, 8
    $region17: #{tpu_custom_call.1} parent=1 // pred_fallthru
      _
    // Predicated region
    $region18: #{tpu_custom_call.1} parent=1 // pred_check
      _
    $region19: #{tpu_custom_call.1} parent=1 // pred_check_branch
      %53 = sbr.rel (0) target = $region21
    $region20: #{tpu_custom_call.1} parent=1 // pred_region
      _
    $region21: #{tpu_custom_call.1} parent=1 // pred_fallthru
      _
    // Predicated region
    $region22: #{tpu_custom_call.1} parent=1 // pred_check
      _
    $region23: #{tpu_custom_call.1} parent=1 // pred_check_branch
      %55 = sbr.rel (0) target = $region25
    $region24: #{tpu_custom_call.1} parent=1 // pred_region
      %s57 = ssub.s32 14336, 14336
      %58 = vsyncadd [#allocation9], %s57
      %s59 = sshll.u32 [#allocation8], 4
      %s60 = int_to_ptr.vmem [resolvable:$true] %s59
      %65 = dma.hbm_to_vmem [thread:$0]  %s5, 14336, %s60, [#allocation9], 448, 448, 28
    $region25: #{tpu_custom_call.1} parent=1 // pred_fallthru
      _
    // Predicated region
    $region26: #{tpu_custom_call.1} parent=1 // pred_check
      _
    $region27: #{tpu_custom_call.1} parent=1 // pred_check_branch
      %67 = sbr.rel (0) target = $region29
    $region28: #{tpu_custom_call.1} parent=1 // pred_region
      _
    $region29: #{tpu_custom_call.1} parent=1 // pred_fallthru
      _
    // Predicated region
    $region30: #{tpu_custom_call.1} parent=1 // pred_check
      _
    $region31: #{tpu_custom_call.1} parent=1 // pred_check_branch
      %69 = sbr.rel (0) target = $region33
    $region32: #{tpu_custom_call.1} parent=1 // pred_region
      %70 = dma.done [#allocation3], 128
    $region33: #{tpu_custom_call.1} parent=1 // pred_fallthru
      _
    // Predicated region
    $region34: #{tpu_custom_call.1} parent=1 // pred_check
      _
    $region35: #{tpu_custom_call.1} parent=1 // pred_check_branch
      %72 = sbr.rel (0) target = $region37
    $region36: #{tpu_custom_call.1} parent=1 // pred_region
      %73 = dma.done [#allocation6], 256
    $region37: #{tpu_custom_call.1} parent=1 // pred_fallthru
      _
    // Predicated region
    $region38: #{tpu_custom_call.1} parent=1 // pred_check
      _
    $region39: #{tpu_custom_call.1} parent=1 // pred_check_branch
      %75 = sbr.rel (0) target = $region41
    $region40: #{tpu_custom_call.1} parent=1 // pred_region
      %76 = dma.done [#allocation6], 2048
    $region41: #{tpu_custom_call.1} parent=1 // pred_fallthru
      _
    // Predicated region
    $region42: #{tpu_custom_call.1} parent=1 // pred_check
      _
    $region43: #{tpu_custom_call.1} parent=1 // pred_check_branch
      %78 = sbr.rel (0) target = $region45
    $region44: #{tpu_custom_call.1} parent=1 // pred_region
      %79 = dma.done [#allocation9], 14336
    $region45: #{tpu_custom_call.1} parent=1 // pred_fallthru
      _
    %v81 = vld [vmem:[#allocation2] sm:$0xff]
    %v82 = vpack.c.bf16 %v81, %v81
    %v83 = vld [vmem:[#allocation5] sm:$0xf]
    %v84 = vld [vmem:[#allocation5 + $0x4] sm:$0xf]
    %v85 = vld [vmem:[#allocation5 + $0x8] sm:$0xf]
    %v86 = vld [vmem:[#allocation5 + $0xc] sm:$0xf]
    %v87 = vld [vmem:[%s2] sm:$0x1]
    %v89 = vlaneseq
    %v90 = vshrl.u32 %v89, 7
    %v91 = vsub.s32 0, %v90
    %v92 = vrot.slane %v87, %v91
    %v98 = vunpack.c.l.b16 %v83
    %v99 = vunpack.c.l.b16 %v84
    %v100 = vunpack.c.l.b16 %v85
    %v101 = vunpack.c.l.b16 %v86
    %v102 = vpack.c.b16 %v99, %v98
    %v103 = vpack.c.b16 %v101, %v100
    %vm106 = vcmask 261120
    %v108 = vsel %vm106, %v82, 0
    %110 = vmatprep.subr.bf16.mxu0 0
    %111 = vmatpush1.bf16.msra.mxu0 %v102
    %112 = vmatprep.subr.bf16.mxu0 0
    %113 = vmatpush1.bf16.msra.mxu0 %v103
    %114 = vmatprep.subr.bf16.mxu0 0
    %115 = vmatpush1.bf16.msra.mxu0 0
    %116 = vmatprep.subr.bf16.mxu0 0
    %117 = vmatpush1.bf16.msra.mxu0 0
    %118 = vmatprep.subr.bf16.mxu0 0
    %119 = vmatpush1.bf16.msra.mxu0 0
    %120 = vmatprep.subr.bf16.mxu0 0
    %121 = vmatpush1.bf16.msra.mxu0 0
    %122 = vmatprep.subr.bf16.mxu0 0
    %123 = vmatpush1.bf16.msra.mxu0 0
    %124 = vmatprep.subr.bf16.mxu0 0
    %125 = vmatpush1.bf16.msra.mxu0 0
    %126 = vmatprep.subr.bf16.mxu0 0
    %127 = vmatpush1.bf16.msra.mxu0 0
    %128 = vmatprep.subr.bf16.mxu0 0
    %129 = vmatpush1.bf16.msra.mxu0 0
    %130 = vmatprep.subr.bf16.mxu0 0
    %131 = vmatpush1.bf16.msra.mxu0 0
    %132 = vmatprep.subr.bf16.mxu0 0
    %133 = vmatpush1.bf16.msra.mxu0 0
    %134 = vmatprep.subr.bf16.mxu0 0
    %135 = vmatpush1.bf16.msra.mxu0 0
    %136 = vmatprep.subr.bf16.mxu0 0
    %137 = vmatpush1.bf16.msra.mxu0 0
    %138 = vmatprep.subr.bf16.mxu0 0
    %139 = vmatpush1.bf16.msra.mxu0 0
    %140 = vmatprep.subr.bf16.mxu0 0
    %141 = vmatpush1.bf16.msra.mxu0 0
    %142 = vmatprep.mubr.bf16.mxu0 0
    %143 = vmatmul.mubr.bf16.gmra.mrb[0].mxu0 %v108
    %v144 = vpop.f32.mrb[0].mxu0
    %v145 = vadd.f32 %v92, %v144
    %v146 = vpop.f32.mrb[0].mxu0
    %v147 = vpop.f32.mrb[0].mxu0
    %v148 = vpop.f32.mrb[0].mxu0
    %149 = vdwg.mxu0
    %v150 = vmax.f32 %v145, 0.0
    %v151 = vpack.c.bf16 %v150, %v150
    %v152 = vld [vmem:[#allocation7] sm:$0xff]
    %v153 = vld [vmem:[#allocation7 + $0x8] sm:$0xff]
    %v154 = vld [vmem:[#allocation7 + $0x10] sm:$0xff]
    %v155 = vld [vmem:[#allocation7 + $0x18] sm:$0xff]
    %v156 = vld [vmem:[#allocation7 + $0x20] sm:$0xff]
    %v157 = vld [vmem:[#allocation7 + $0x28] sm:$0xff]
    %v158 = vld [vmem:[#allocation7 + $0x30] sm:$0xff]
    %v159 = vld [vmem:[#allocation7 + $0x38] sm:$0xff]
    %v160 = vld [vmem:[#allocation7 + $0x40] sm:$0xff]
    %v161 = vld [vmem:[#allocation7 + $0x48] sm:$0xff]
    %v162 = vld [vmem:[#allocation7 + $0x50] sm:$0xff]
    %v163 = vld [vmem:[#allocation7 + $0x58] sm:$0xff]
    %v164 = vld [vmem:[#allocation7 + $0x60] sm:$0xff]
    %v165 = vld [vmem:[#allocation7 + $0x68] sm:$0xff]
    %v166 = vld [vmem:[#allocation7 + $0x70] sm:$0xff]
    %v167 = vld [vmem:[#allocation7 + $0x78] sm:$0xff]
    %v168 = vld [vmem:[%s4] sm:$0x3]
    %v170 = vlaneseq
    %v171 = vshrl.u32 %v170, 7
    %v172 = vsub.s32 0, %v171
    %v173 = vrot.slane %v168, %v172
    %v174 = vlaneseq
    %v175 = vshrl.u32 %v174, 7
    %v176 = vsub.s32 1, %v175
    %v177 = vrot.slane %v168, %v176
    %v196 = vunpack.c.l.b16 %v152
    %v197 = vunpack.c.h.b16 %v152
    %v198 = vunpack.c.l.b16 %v153
    %v199 = vunpack.c.h.b16 %v153
    %v200 = vunpack.c.l.b16 %v154
    %v201 = vunpack.c.h.b16 %v154
    %v202 = vunpack.c.l.b16 %v155
    %v203 = vunpack.c.h.b16 %v155
    %v204 = vunpack.c.l.b16 %v156
    %v205 = vunpack.c.h.b16 %v156
    %v206 = vunpack.c.l.b16 %v157
    %v207 = vunpack.c.h.b16 %v157
    %v208 = vunpack.c.l.b16 %v158
    %v209 = vunpack.c.h.b16 %v158
    %v210 = vunpack.c.l.b16 %v159
    %v211 = vunpack.c.h.b16 %v159
    %v212 = vunpack.c.l.b16 %v160
    %v213 = vunpack.c.h.b16 %v160
    %v214 = vunpack.c.l.b16 %v161
    %v215 = vunpack.c.h.b16 %v161
    %v216 = vunpack.c.l.b16 %v162
    %v217 = vunpack.c.h.b16 %v162
    %v218 = vunpack.c.l.b16 %v163
    %v219 = vunpack.c.h.b16 %v163
    %v220 = vunpack.c.l.b16 %v164
    %v221 = vunpack.c.h.b16 %v164
    %v222 = vunpack.c.l.b16 %v165
    %v223 = vunpack.c.h.b16 %v165
    %v224 = vunpack.c.l.b16 %v166
    %v225 = vunpack.c.h.b16 %v166
    %v226 = vunpack.c.l.b16 %v167
    %v227 = vunpack.c.h.b16 %v167
    %v228 = vpack.c.b16 %v198, %v196
    %v229 = vpack.c.b16 %v199, %v197
    %v230 = vpack.c.b16 %v202, %v200
    %v231 = vpack.c.b16 %v203, %v201
    %v232 = vpack.c.b16 %v206, %v204
    %v233 = vpack.c.b16 %v207, %v205
    %v234 = vpack.c.b16 %v210, %v208
    %v235 = vpack.c.b16 %v211, %v209
    %v236 = vpack.c.b16 %v214, %v212
    %v237 = vpack.c.b16 %v215, %v213
    %v238 = vpack.c.b16 %v218, %v216
    %v239 = vpack.c.b16 %v219, %v217
    %v240 = vpack.c.b16 %v222, %v220
    %v241 = vpack.c.b16 %v223, %v221
    %v242 = vpack.c.b16 %v226, %v224
    %v243 = vpack.c.b16 %v227, %v225
    %260 = vmatprep.subr.bf16.mxu0 %v229
    %261 = vmatpush1.bf16.msra.mxu0 %v228
    %262 = vmatprep.subr.bf16.mxu0 %v231
    %263 = vmatpush1.bf16.msra.mxu0 %v230
    %264 = vmatprep.subr.bf16.mxu0 %v233
    %265 = vmatpush1.bf16.msra.mxu0 %v232
    %266 = vmatprep.subr.bf16.mxu0 %v235
    %267 = vmatpush1.bf16.msra.mxu0 %v234
    %268 = vmatprep.subr.bf16.mxu0 %v237
    %269 = vmatpush1.bf16.msra.mxu0 %v236
    %270 = vmatprep.subr.bf16.mxu0 %v239
    %271 = vmatpush1.bf16.msra.mxu0 %v238
    %272 = vmatprep.subr.bf16.mxu0 %v241
    %273 = vmatpush1.bf16.msra.mxu0 %v240
    %274 = vmatprep.subr.bf16.mxu0 %v243
    %275 = vmatpush1.bf16.msra.mxu0 %v242
    %276 = vmatprep.subr.bf16.mxu0 0
    %277 = vmatpush1.bf16.msra.mxu0 0
    %278 = vmatprep.subr.bf16.mxu0 0
    %279 = vmatpush1.bf16.msra.mxu0 0
    %280 = vmatprep.subr.bf16.mxu0 0
    %281 = vmatpush1.bf16.msra.mxu0 0
    %282 = vmatprep.subr.bf16.mxu0 0
    %283 = vmatpush1.bf16.msra.mxu0 0
    %284 = vmatprep.subr.bf16.mxu0 0
    %285 = vmatpush1.bf16.msra.mxu0 0
    %286 = vmatprep.subr.bf16.mxu0 0
    %287 = vmatpush1.bf16.msra.mxu0 0
    %288 = vmatprep.subr.bf16.mxu0 0
    %289 = vmatpush1.bf16.msra.mxu0 0
    %290 = vmatprep.subr.bf16.mxu0 0
    %291 = vmatpush1.bf16.msra.mxu0 0
    %292 = vmatprep.mubr.bf16.mxu0 0
    %293 = vmatmul.mubr.bf16.gmra.mrb[0].mxu0 %v151
    %v294 = vpop.f32.mrb[0].mxu0
    %v295 = vadd.f32 %v173, %v294
    %v296 = vpop.f32.mrb[0].mxu0
    %v297 = vadd.f32 %v177, %v296
    %v298 = vpop.f32.mrb[0].mxu0
    %v299 = vpop.f32.mrb[0].mxu0
    %300 = vdwg.mxu0
    %v301 = vmax.f32 %v295, 0.0
    %v302 = vmax.f32 %v297, 0.0
    %v303 = vpack.c.bf16 %v301, %v301
    %v304 = vpack.c.bf16 %v302, %v302
    %v305 = vld [vmem:[#allocation8] sm:$0xff]
    %v306 = vld [vmem:[#allocation8 + $0x8] sm:$0xff]
    %v307 = vld [vmem:[#allocation8 + $0x10] sm:$0xff]
    %v308 = vld [vmem:[#allocation8 + $0x18] sm:$0xf]
    %v309 = vld [vmem:[#allocation8 + $0x1c] sm:$0xff]
    %v310 = vld [vmem:[#allocation8 + $0x24] sm:$0xff]
    %v311 = vld [vmem:[#allocation8 + $0x2c] sm:$0xff]
    %v312 = vld [vmem:[#allocation8 + $0x34] sm:$0xf]
    %v313 = vld [vmem:[#allocation8 + $0x38] sm:$0xff]
    %v314 = vld [vmem:[#allocation8 + $0x40] sm:$0xff]
    %v315 = vld [vmem:[#allocation8 + $0x48] sm:$0xff]
    %v316 = vld [vmem:[#allocation8 + $0x50] sm:$0xf]
    %v317 = vld [vmem:[#allocation8 + $0x54] sm:$0xff]
    %v318 = vld [vmem:[#allocation8 + $0x5c] sm:$0xff]
    %v319 = vld [vmem:[#allocation8 + $0x64] sm:$0xff]
    %v320 = vld [vmem:[#allocation8 + $0x6c] sm:$0xf]
    %v321 = vld [vmem:[#allocation8 + $0x70] sm:$0xff]
    %v322 = vld [vmem:[#allocation8 + $0x78] sm:$0xff]
    %v323 = vld [vmem:[#allocation8 + $0x80] sm:$0xff]
    %v324 = vld [vmem:[#allocation8 + $0x88] sm:$0xf]
    %v325 = vld [vmem:[#allocation8 + $0x8c] sm:$0xff]
    %v326 = vld [vmem:[#allocation8 + $0x94] sm:$0xff]
    %v327 = vld [vmem:[#allocation8 + $0x9c] sm:$0xff]
    %v328 = vld [vmem:[#allocation8 + $0xa4] sm:$0xf]
    %v329 = vld [vmem:[#allocation8 + $0xa8] sm:$0xff]
    %v330 = vld [vmem:[#allocation8 + $0xb0] sm:$0xff]
    %v331 = vld [vmem:[#allocation8 + $0xb8] sm:$0xff]
    %v332 = vld [vmem:[#allocation8 + $0xc0] sm:$0xf]
    %v333 = vld [vmem:[#allocation8 + $0xc4] sm:$0xff]
    %v334 = vld [vmem:[#allocation8 + $0xcc] sm:$0xff]
    %v335 = vld [vmem:[#allocation8 + $0xd4] sm:$0xff]
    %v336 = vld [vmem:[#allocation8 + $0xdc] sm:$0xf]
    %v337 = vld [vmem:[#allocation8 + $0xe0] sm:$0xff]
    %v338 = vld [vmem:[#allocation8 + $0xe8] sm:$0xff]
    %v339 = vld [vmem:[#allocation8 + $0xf0] sm:$0xff]
    %v340 = vld [vmem:[#allocation8 + $0xf8] sm:$0xf]
    %v341 = vld [vmem:[#allocation8 + $0xfc] sm:$0xff]
    %v342 = vld [vmem:[#allocation8 + $0x104] sm:$0xff]
    %v343 = vld [vmem:[#allocation8 + $0x10c] sm:$0xff]
    %v344 = vld [vmem:[#allocation8 + $0x114] sm:$0xf]
    %v345 = vld [vmem:[#allocation8 + $0x118] sm:$0xff]
    %v346 = vld [vmem:[#allocation8 + $0x120] sm:$0xff]
    %v347 = vld [vmem:[#allocation8 + $0x128] sm:$0xff]
    %v348 = vld [vmem:[#allocation8 + $0x130] sm:$0xf]
    %v349 = vld [vmem:[#allocation8 + $0x134] sm:$0xff]
    %v350 = vld [vmem:[#allocation8 + $0x13c] sm:$0xff]
    %v351 = vld [vmem:[#allocation8 + $0x144] sm:$0xff]
    %v352 = vld [vmem:[#allocation8 + $0x14c] sm:$0xf]
    %v353 = vld [vmem:[#allocation8 + $0x150] sm:$0xff]
    %v354 = vld [vmem:[#allocation8 + $0x158] sm:$0xff]
    %v355 = vld [vmem:[#allocation8 + $0x160] sm:$0xff]
    %v356 = vld [vmem:[#allocation8 + $0x168] sm:$0xf]
    %v357 = vld [vmem:[#allocation8 + $0x16c] sm:$0xff]
    %v358 = vld [vmem:[#allocation8 + $0x174] sm:$0xff]
    %v359 = vld [vmem:[#allocation8 + $0x17c] sm:$0xff]
    %v360 = vld [vmem:[#allocation8 + $0x184] sm:$0xf]
    %v361 = vld [vmem:[#allocation8 + $0x188] sm:$0xff]
    %v362 = vld [vmem:[#allocation8 + $0x190] sm:$0xff]
    %v363 = vld [vmem:[#allocation8 + $0x198] sm:$0xff]
    %v364 = vld [vmem:[#allocation8 + $0x1a0] sm:$0xf]
    %v365 = vld [vmem:[#allocation8 + $0x1a4] sm:$0xff]
    %v366 = vld [vmem:[#allocation8 + $0x1ac] sm:$0xff]
    %v367 = vld [vmem:[#allocation8 + $0x1b4] sm:$0xff]
    %v368 = vld [vmem:[#allocation8 + $0x1bc] sm:$0xf]
    %v369 = vld [vmem:[#allocation8 + $0x1c0] sm:$0xff]
    %v370 = vld [vmem:[#allocation8 + $0x1c8] sm:$0xff]
    %v371 = vld [vmem:[#allocation8 + $0x1d0] sm:$0xff]
    %v372 = vld [vmem:[#allocation8 + $0x1d8] sm:$0xf]
    %v373 = vld [vmem:[#allocation8 + $0x1dc] sm:$0xff]
    %v374 = vld [vmem:[#allocation8 + $0x1e4] sm:$0xff]
    %v375 = vld [vmem:[#allocation8 + $0x1ec] sm:$0xff]
    %v376 = vld [vmem:[#allocation8 + $0x1f4] sm:$0xf]
    %v377 = vld [vmem:[#allocation8 + $0x1f8] sm:$0xff]
    %v378 = vld [vmem:[#allocation8 + $0x200] sm:$0xff]
    %v379 = vld [vmem:[#allocation8 + $0x208] sm:$0xff]
    %v380 = vld [vmem:[#allocation8 + $0x210] sm:$0xf]
    %v381 = vld [vmem:[#allocation8 + $0x214] sm:$0xff]
    %v382 = vld [vmem:[#allocation8 + $0x21c] sm:$0xff]
    %v383 = vld [vmem:[#allocation8 + $0x224] sm:$0xff]
    %v384 = vld [vmem:[#allocation8 + $0x22c] sm:$0xf]
    %v385 = vld [vmem:[#allocation8 + $0x230] sm:$0xff]
    %v386 = vld [vmem:[#allocation8 + $0x238] sm:$0xff]
    %v387 = vld [vmem:[#allocation8 + $0x240] sm:$0xff]
    %v388 = vld [vmem:[#allocation8 + $0x248] sm:$0xf]
    %v389 = vld [vmem:[#allocation8 + $0x24c] sm:$0xff]
    %v390 = vld [vmem:[#allocation8 + $0x254] sm:$0xff]
    %v391 = vld [vmem:[#allocation8 + $0x25c] sm:$0xff]
    %v392 = vld [vmem:[#allocation8 + $0x264] sm:$0xf]
    %v393 = vld [vmem:[#allocation8 + $0x268] sm:$0xff]
    %v394 = vld [vmem:[#allocation8 + $0x270] sm:$0xff]
    %v395 = vld [vmem:[#allocation8 + $0x278] sm:$0xff]
    %v396 = vld [vmem:[#allocation8 + $0x280] sm:$0xf]
    %v397 = vld [vmem:[#allocation8 + $0x284] sm:$0xff]
    %v398 = vld [vmem:[#allocation8 + $0x28c] sm:$0xff]
    %v399 = vld [vmem:[#allocation8 + $0x294] sm:$0xff]
    %v400 = vld [vmem:[#allocation8 + $0x29c] sm:$0xf]
    %v401 = vld [vmem:[#allocation8 + $0x2a0] sm:$0xff]
    %v402 = vld [vmem:[#allocation8 + $0x2a8] sm:$0xff]
    %v403 = vld [vmem:[#allocation8 + $0x2b0] sm:$0xff]
    %v404 = vld [vmem:[#allocation8 + $0x2b8] sm:$0xf]
    %v405 = vld [vmem:[#allocation8 + $0x2bc] sm:$0xff]
    %v406 = vld [vmem:[#allocation8 + $0x2c4] sm:$0xff]
    %v407 = vld [vmem:[#allocation8 + $0x2cc] sm:$0xff]
    %v408 = vld [vmem:[#allocation8 + $0x2d4] sm:$0xf]
    %v409 = vld [vmem:[#allocation8 + $0x2d8] sm:$0xff]
    %v410 = vld [vmem:[#allocation8 + $0x2e0] sm:$0xff]
    %v411 = vld [vmem:[#allocation8 + $0x2e8] sm:$0xff]
    %v412 = vld [vmem:[#allocation8 + $0x2f0] sm:$0xf]
    %v413 = vld [vmem:[#allocation8 + $0x2f4] sm:$0xff]
    %v414 = vld [vmem:[#allocation8 + $0x2fc] sm:$0xff]
    %v415 = vld [vmem:[#allocation8 + $0x304] sm:$0xff]
    %v416 = vld [vmem:[#allocation8 + $0x30c] sm:$0xf]
    %v417 = vld [vmem:[#allocation8 + $0x310] sm:$0xff]
    %v418 = vld [vmem:[#allocation8 + $0x318] sm:$0xff]
    %v419 = vld [vmem:[#allocation8 + $0x320] sm:$0xff]
    %v420 = vld [vmem:[#allocation8 + $0x328] sm:$0xf]
    %v421 = vld [vmem:[#allocation8 + $0x32c] sm:$0xff]
    %v422 = vld [vmem:[#allocation8 + $0x334] sm:$0xff]
    %v423 = vld [vmem:[#allocation8 + $0x33c] sm:$0xff]
    %v424 = vld [vmem:[#allocation8 + $0x344] sm:$0xf]
    %v425 = vld [vmem:[#allocation8 + $0x348] sm:$0xff]
    %v426 = vld [vmem:[#allocation8 + $0x350] sm:$0xff]
    %v427 = vld [vmem:[#allocation8 + $0x358] sm:$0xff]
    %v428 = vld [vmem:[#allocation8 + $0x360] sm:$0xf]
    %v429 = vld [vmem:[#allocation8 + $0x364] sm:$0xff]
    %v430 = vld [vmem:[#allocation8 + $0x36c] sm:$0xff]
    %v431 = vld [vmem:[#allocation8 + $0x374] sm:$0xff]
    %v432 = vld [vmem:[#allocation8 + $0x37c] sm:$0xf]
    %v433 = vld [vmem:[%s6] sm:$0xff]
    %v435 = vlaneseq
    %v436 = vshrl.u32 %v435, 7
    %v437 = vsub.s32 0, %v436
    %v438 = vrot.slane %v433, %v437
    %v439 = vlaneseq
    %v440 = vshrl.u32 %v439, 7
    %v441 = vsub.s32 1, %v440
    %v442 = vrot.slane %v433, %v441
    %v443 = vlaneseq
    %v444 = vshrl.u32 %v443, 7
    %v445 = vsub.s32 2, %v444
    %v446 = vrot.slane %v433, %v445
    %v447 = vlaneseq
    %v448 = vshrl.u32 %v447, 7
    %v449 = vsub.s32 3, %v448
    %v450 = vrot.slane %v433, %v449
    %v451 = vlaneseq
    %v452 = vshrl.u32 %v451, 7
    %v453 = vsub.s32 4, %v452
    %v454 = vrot.slane %v433, %v453
    %v455 = vlaneseq
    %v456 = vshrl.u32 %v455, 7
    %v457 = vsub.s32 5, %v456
    %v458 = vrot.slane %v433, %v457
    %v459 = vlaneseq
    %v460 = vshrl.u32 %v459, 7
    %v461 = vsub.s32 6, %v460
    %v462 = vrot.slane %v433, %v461
    %v598 = vunpack.c.l.b16 %v305
    %v599 = vunpack.c.h.b16 %v305
    %v600 = vunpack.c.l.b16 %v306
    %v601 = vunpack.c.h.b16 %v306
    %v602 = vunpack.c.l.b16 %v307
    %v603 = vunpack.c.h.b16 %v307
    %v604 = vunpack.c.l.b16 %v308
    %v605 = vunpack.c.l.b16 %v309
    %v606 = vunpack.c.h.b16 %v309
    %v607 = vunpack.c.l.b16 %v310
    %v608 = vunpack.c.h.b16 %v310
    %v609 = vunpack.c.l.b16 %v311
    %v610 = vunpack.c.h.b16 %v311
    %v611 = vunpack.c.l.b16 %v312
    %v612 = vunpack.c.l.b16 %v313
    %v613 = vunpack.c.h.b16 %v313
    %v614 = vunpack.c.l.b16 %v314
    %v615 = vunpack.c.h.b16 %v314
    %v616 = vunpack.c.l.b16 %v315
    %v617 = vunpack.c.h.b16 %v315
    %v618 = vunpack.c.l.b16 %v316
    %v619 = vunpack.c.l.b16 %v317
    %v620 = vunpack.c.h.b16 %v317
    %v621 = vunpack.c.l.b16 %v318
    %v622 = vunpack.c.h.b16 %v318
    %v623 = vunpack.c.l.b16 %v319
    %v624 = vunpack.c.h.b16 %v319
    %v625 = vunpack.c.l.b16 %v320
    %v626 = vunpack.c.l.b16 %v321
    %v627 = vunpack.c.h.b16 %v321
    %v628 = vunpack.c.l.b16 %v322
    %v629 = vunpack.c.h.b16 %v322
    %v630 = vunpack.c.l.b16 %v323
    %v631 = vunpack.c.h.b16 %v323
    %v632 = vunpack.c.l.b16 %v324
    %v633 = vunpack.c.l.b16 %v325
    %v634 = vunpack.c.h.b16 %v325
    %v635 = vunpack.c.l.b16 %v326
    %v636 = vunpack.c.h.b16 %v326
    %v637 = vunpack.c.l.b16 %v327
    %v638 = vunpack.c.h.b16 %v327
    %v639 = vunpack.c.l.b16 %v328
    %v640 = vunpack.c.l.b16 %v329
    %v641 = vunpack.c.h.b16 %v329
    %v642 = vunpack.c.l.b16 %v330
    %v643 = vunpack.c.h.b16 %v330
    %v644 = vunpack.c.l.b16 %v331
    %v645 = vunpack.c.h.b16 %v331
    %v646 = vunpack.c.l.b16 %v332
    %v647 = vunpack.c.l.b16 %v333
    %v648 = vunpack.c.h.b16 %v333
    %v649 = vunpack.c.l.b16 %v334
    %v650 = vunpack.c.h.b16 %v334
    %v651 = vunpack.c.l.b16 %v335
    %v652 = vunpack.c.h.b16 %v335
    %v653 = vunpack.c.l.b16 %v336
    %v654 = vunpack.c.l.b16 %v337
    %v655 = vunpack.c.h.b16 %v337
    %v656 = vunpack.c.l.b16 %v338
    %v657 = vunpack.c.h.b16 %v338
    %v658 = vunpack.c.l.b16 %v339
    %v659 = vunpack.c.h.b16 %v339
    %v660 = vunpack.c.l.b16 %v340
    %v661 = vunpack.c.l.b16 %v341
    %v662 = vunpack.c.h.b16 %v341
    %v663 = vunpack.c.l.b16 %v342
    %v664 = vunpack.c.h.b16 %v342
    %v665 = vunpack.c.l.b16 %v343
    %v666 = vunpack.c.h.b16 %v343
    %v667 = vunpack.c.l.b16 %v344
    %v668 = vunpack.c.l.b16 %v345
    %v669 = vunpack.c.h.b16 %v345
    %v670 = vunpack.c.l.b16 %v346
    %v671 = vunpack.c.h.b16 %v346
    %v672 = vunpack.c.l.b16 %v347
    %v673 = vunpack.c.h.b16 %v347
    %v674 = vunpack.c.l.b16 %v348
    %v675 = vunpack.c.l.b16 %v349
    %v676 = vunpack.c.h.b16 %v349
    %v677 = vunpack.c.l.b16 %v350
    %v678 = vunpack.c.h.b16 %v350
    %v679 = vunpack.c.l.b16 %v351
    %v680 = vunpack.c.h.b16 %v351
    %v681 = vunpack.c.l.b16 %v352
    %v682 = vunpack.c.l.b16 %v353
    %v683 = vunpack.c.h.b16 %v353
    %v684 = vunpack.c.l.b16 %v354
    %v685 = vunpack.c.h.b16 %v354
    %v686 = vunpack.c.l.b16 %v355
    %v687 = vunpack.c.h.b16 %v355
    %v688 = vunpack.c.l.b16 %v356
    %v689 = vunpack.c.l.b16 %v357
    %v690 = vunpack.c.h.b16 %v357
    %v691 = vunpack.c.l.b16 %v358
    %v692 = vunpack.c.h.b16 %v358
    %v693 = vunpack.c.l.b16 %v359
    %v694 = vunpack.c.h.b16 %v359
    %v695 = vunpack.c.l.b16 %v360
    %v696 = vunpack.c.l.b16 %v361
    %v697 = vunpack.c.h.b16 %v361
    %v698 = vunpack.c.l.b16 %v362
    %v699 = vunpack.c.h.b16 %v362
    %v700 = vunpack.c.l.b16 %v363
    %v701 = vunpack.c.h.b16 %v363
    %v702 = vunpack.c.l.b16 %v364
    %v703 = vunpack.c.l.b16 %v365
    %v704 = vunpack.c.h.b16 %v365
    %v705 = vunpack.c.l.b16 %v366
    %v706 = vunpack.c.h.b16 %v366
    %v707 = vunpack.c.l.b16 %v367
    %v708 = vunpack.c.h.b16 %v367
    %v709 = vunpack.c.l.b16 %v368
    %v710 = vunpack.c.l.b16 %v369
    %v711 = vunpack.c.h.b16 %v369
    %v712 = vunpack.c.l.b16 %v370
    %v713 = vunpack.c.h.b16 %v370
    %v714 = vunpack.c.l.b16 %v371
    %v715 = vunpack.c.h.b16 %v371
    %v716 = vunpack.c.l.b16 %v372
    %v717 = vunpack.c.l.b16 %v373
    %v718 = vunpack.c.h.b16 %v373
    %v719 = vunpack.c.l.b16 %v374
    %v720 = vunpack.c.h.b16 %v374
    %v721 = vunpack.c.l.b16 %v375
    %v722 = vunpack.c.h.b16 %v375
    %v723 = vunpack.c.l.b16 %v376
    %v724 = vunpack.c.l.b16 %v377
    %v725 = vunpack.c.h.b16 %v377
    %v726 = vunpack.c.l.b16 %v378
    %v727 = vunpack.c.h.b16 %v378
    %v728 = vunpack.c.l.b16 %v379
    %v729 = vunpack.c.h.b16 %v379
    %v730 = vunpack.c.l.b16 %v380
    %v731 = vunpack.c.l.b16 %v381
    %v732 = vunpack.c.h.b16 %v381
    %v733 = vunpack.c.l.b16 %v382
    %v734 = vunpack.c.h.b16 %v382
    %v735 = vunpack.c.l.b16 %v383
    %v736 = vunpack.c.h.b16 %v383
    %v737 = vunpack.c.l.b16 %v384
    %v738 = vunpack.c.l.b16 %v385
    %v739 = vunpack.c.h.b16 %v385
    %v740 = vunpack.c.l.b16 %v386
    %v741 = vunpack.c.h.b16 %v386
    %v742 = vunpack.c.l.b16 %v387
    %v743 = vunpack.c.h.b16 %v387
    %v744 = vunpack.c.l.b16 %v388
    %v745 = vunpack.c.l.b16 %v389
    %v746 = vunpack.c.h.b16 %v389
    %v747 = vunpack.c.l.b16 %v390
    %v748 = vunpack.c.h.b16 %v390
    %v749 = vunpack.c.l.b16 %v391
    %v750 = vunpack.c.h.b16 %v391
    %v751 = vunpack.c.l.b16 %v392
    %v752 = vunpack.c.l.b16 %v393
    %v753 = vunpack.c.h.b16 %v393
    %v754 = vunpack.c.l.b16 %v394
    %v755 = vunpack.c.h.b16 %v394
    %v756 = vunpack.c.l.b16 %v395
    %v757 = vunpack.c.h.b16 %v395
    %v758 = vunpack.c.l.b16 %v396
    %v759 = vunpack.c.l.b16 %v397
    %v760 = vunpack.c.h.b16 %v397
    %v761 = vunpack.c.l.b16 %v398
    %v762 = vunpack.c.h.b16 %v398
    %v763 = vunpack.c.l.b16 %v399
    %v764 = vunpack.c.h.b16 %v399
    %v765 = vunpack.c.l.b16 %v400
    %v766 = vunpack.c.l.b16 %v401
    %v767 = vunpack.c.h.b16 %v401
    %v768 = vunpack.c.l.b16 %v402
    %v769 = vunpack.c.h.b16 %v402
    %v770 = vunpack.c.l.b16 %v403
    %v771 = vunpack.c.h.b16 %v403
    %v772 = vunpack.c.l.b16 %v404
    %v773 = vunpack.c.l.b16 %v405
    %v774 = vunpack.c.h.b16 %v405
    %v775 = vunpack.c.l.b16 %v406
    %v776 = vunpack.c.h.b16 %v406
    %v777 = vunpack.c.l.b16 %v407
    %v778 = vunpack.c.h.b16 %v407
    %v779 = vunpack.c.l.b16 %v408
    %v780 = vunpack.c.l.b16 %v409
    %v781 = vunpack.c.h.b16 %v409
    %v782 = vunpack.c.l.b16 %v410
    %v783 = vunpack.c.h.b16 %v410
    %v784 = vunpack.c.l.b16 %v411
    %v785 = vunpack.c.h.b16 %v411
    %v786 = vunpack.c.l.b16 %v412
    %v787 = vunpack.c.l.b16 %v413
    %v788 = vunpack.c.h.b16 %v413
    %v789 = vunpack.c.l.b16 %v414
    %v790 = vunpack.c.h.b16 %v414
    %v791 = vunpack.c.l.b16 %v415
    %v792 = vunpack.c.h.b16 %v415
    %v793 = vunpack.c.l.b16 %v416
    %v794 = vunpack.c.l.b16 %v417
    %v795 = vunpack.c.h.b16 %v417
    %v796 = vunpack.c.l.b16 %v418
    %v797 = vunpack.c.h.b16 %v418
    %v798 = vunpack.c.l.b16 %v419
    %v799 = vunpack.c.h.b16 %v419
    %v800 = vunpack.c.l.b16 %v420
    %v801 = vunpack.c.l.b16 %v421
    %v802 = vunpack.c.h.b16 %v421
    %v803 = vunpack.c.l.b16 %v422
    %v804 = vunpack.c.h.b16 %v422
    %v805 = vunpack.c.l.b16 %v423
    %v806 = vunpack.c.h.b16 %v423
    %v807 = vunpack.c.l.b16 %v424
    %v808 = vunpack.c.l.b16 %v425
    %v809 = vunpack.c.h.b16 %v425
    %v810 = vunpack.c.l.b16 %v426
    %v811 = vunpack.c.h.b16 %v426
    %v812 = vunpack.c.l.b16 %v427
    %v813 = vunpack.c.h.b16 %v427
    %v814 = vunpack.c.l.b16 %v428
    %v815 = vunpack.c.l.b16 %v429
    %v816 = vunpack.c.h.b16 %v429
    %v817 = vunpack.c.l.b16 %v430
    %v818 = vunpack.c.h.b16 %v430
    %v819 = vunpack.c.l.b16 %v431
    %v820 = vunpack.c.h.b16 %v431
    %v821 = vunpack.c.l.b16 %v432
    %v822 = vpack.c.b16 %v605, %v598
    %v823 = vpack.c.b16 %v606, %v599
    %v824 = vpack.c.b16 %v607, %v600
    %v825 = vpack.c.b16 %v608, %v601
    %v826 = vpack.c.b16 %v609, %v602
    %v827 = vpack.c.b16 %v610, %v603
    %v828 = vpack.c.b16 %v611, %v604
    %v829 = vpack.c.b16 %v619, %v612
    %v830 = vpack.c.b16 %v620, %v613
    %v831 = vpack.c.b16 %v621, %v614
    %v832 = vpack.c.b16 %v622, %v615
    %v833 = vpack.c.b16 %v623, %v616
    %v834 = vpack.c.b16 %v624, %v617
    %v835 = vpack.c.b16 %v625, %v618
    %v836 = vpack.c.b16 %v633, %v626
    %v837 = vpack.c.b16 %v634, %v627
    %v838 = vpack.c.b16 %v635, %v628
    %v839 = vpack.c.b16 %v636, %v629
    %v840 = vpack.c.b16 %v637, %v630
    %v841 = vpack.c.b16 %v638, %v631
    %v842 = vpack.c.b16 %v639, %v632
    %v843 = vpack.c.b16 %v647, %v640
    %v844 = vpack.c.b16 %v648, %v641
    %v845 = vpack.c.b16 %v649, %v642
    %v846 = vpack.c.b16 %v650, %v643
    %v847 = vpack.c.b16 %v651, %v644
    %v848 = vpack.c.b16 %v652, %v645
    %v849 = vpack.c.b16 %v653, %v646
    %v850 = vpack.c.b16 %v661, %v654
    %v851 = vpack.c.b16 %v662, %v655
    %v852 = vpack.c.b16 %v663, %v656
    %v853 = vpack.c.b16 %v664, %v657
    %v854 = vpack.c.b16 %v665, %v658
    %v855 = vpack.c.b16 %v666, %v659
    %v856 = vpack.c.b16 %v667, %v660
    %v857 = vpack.c.b16 %v675, %v668
    %v858 = vpack.c.b16 %v676, %v669
    %v859 = vpack.c.b16 %v677, %v670
    %v860 = vpack.c.b16 %v678, %v671
    %v861 = vpack.c.b16 %v679, %v672
    %v862 = vpack.c.b16 %v680, %v673
    %v863 = vpack.c.b16 %v681, %v674
    %v864 = vpack.c.b16 %v689, %v682
    %v865 = vpack.c.b16 %v690, %v683
    %v866 = vpack.c.b16 %v691, %v684
    %v867 = vpack.c.b16 %v692, %v685
    %v868 = vpack.c.b16 %v693, %v686
    %v869 = vpack.c.b16 %v694, %v687
    %v870 = vpack.c.b16 %v695, %v688
    %v871 = vpack.c.b16 %v703, %v696
    %v872 = vpack.c.b16 %v704, %v697
    %v873 = vpack.c.b16 %v705, %v698
    %v874 = vpack.c.b16 %v706, %v699
    %v875 = vpack.c.b16 %v707, %v700
    %v876 = vpack.c.b16 %v708, %v701
    %v877 = vpack.c.b16 %v709, %v702
    %v878 = vpack.c.b16 %v717, %v710
    %v879 = vpack.c.b16 %v718, %v711
    %v880 = vpack.c.b16 %v719, %v712
    %v881 = vpack.c.b16 %v720, %v713
    %v882 = vpack.c.b16 %v721, %v714
    %v883 = vpack.c.b16 %v722, %v715
    %v884 = vpack.c.b16 %v723, %v716
    %v885 = vpack.c.b16 %v731, %v724
    %v886 = vpack.c.b16 %v732, %v725
    %v887 = vpack.c.b16 %v733, %v726
    %v888 = vpack.c.b16 %v734, %v727
    %v889 = vpack.c.b16 %v735, %v728
    %v890 = vpack.c.b16 %v736, %v729
    %v891 = vpack.c.b16 %v737, %v730
    %v892 = vpack.c.b16 %v745, %v738
    %v893 = vpack.c.b16 %v746, %v739
    %v894 = vpack.c.b16 %v747, %v740
    %v895 = vpack.c.b16 %v748, %v741
    %v896 = vpack.c.b16 %v749, %v742
    %v897 = vpack.c.b16 %v750, %v743
    %v898 = vpack.c.b16 %v751, %v744
    %v899 = vpack.c.b16 %v759, %v752
    %v900 = vpack.c.b16 %v760, %v753
    %v901 = vpack.c.b16 %v761, %v754
    %v902 = vpack.c.b16 %v762, %v755
    %v903 = vpack.c.b16 %v763, %v756
    %v904 = vpack.c.b16 %v764, %v757
    %v905 = vpack.c.b16 %v765, %v758
    %v906 = vpack.c.b16 %v773, %v766
    %v907 = vpack.c.b16 %v774, %v767
    %v908 = vpack.c.b16 %v775, %v768
    %v909 = vpack.c.b16 %v776, %v769
    %v910 = vpack.c.b16 %v777, %v770
    %v911 = vpack.c.b16 %v778, %v771
    %v912 = vpack.c.b16 %v779, %v772
    %v913 = vpack.c.b16 %v787, %v780
    %v914 = vpack.c.b16 %v788, %v781
    %v915 = vpack.c.b16 %v789, %v782
    %v916 = vpack.c.b16 %v790, %v783
    %v917 = vpack.c.b16 %v791, %v784
    %v918 = vpack.c.b16 %v792, %v785
    %v919 = vpack.c.b16 %v793, %v786
    %v920 = vpack.c.b16 %v801, %v794
    %v921 = vpack.c.b16 %v802, %v795
    %v922 = vpack.c.b16 %v803, %v796
    %v923 = vpack.c.b16 %v804, %v797
    %v924 = vpack.c.b16 %v805, %v798
    %v925 = vpack.c.b16 %v806, %v799
    %v926 = vpack.c.b16 %v807, %v800
    %v927 = vpack.c.b16 %v815, %v808
    %v928 = vpack.c.b16 %v816, %v809
    %v929 = vpack.c.b16 %v817, %v810
    %v930 = vpack.c.b16 %v818, %v811
    %v931 = vpack.c.b16 %v819, %v812
    %v932 = vpack.c.b16 %v820, %v813
    %v933 = vpack.c.b16 %v821, %v814
    %1046 = vmatprep.subr.bf16.mxu0 %v823
    %1047 = vmatpush1.bf16.msra.mxu0 %v822
    %1048 = vmatprep.subr.bf16.mxu0 %v830
    %1049 = vmatpush1.bf16.msra.mxu0 %v829
    %1050 = vmatprep.subr.bf16.mxu0 %v837
    %1051 = vmatpush1.bf16.msra.mxu0 %v836
    %1052 = vmatprep.subr.bf16.mxu0 %v844
    %1053 = vmatpush1.bf16.msra.mxu0 %v843
    %1054 = vmatprep.subr.bf16.mxu0 %v851
    %1055 = vmatpush1.bf16.msra.mxu0 %v850
    %1056 = vmatprep.subr.bf16.mxu0 %v858
    %1057 = vmatpush1.bf16.msra.mxu0 %v857
    %1058 = vmatprep.subr.bf16.mxu0 %v865
    %1059 = vmatpush1.bf16.msra.mxu0 %v864
    %1060 = vmatprep.subr.bf16.mxu0 %v872
    %1061 = vmatpush1.bf16.msra.mxu0 %v871
    %1062 = vmatprep.subr.bf16.mxu0 %v879
    %1063 = vmatpush1.bf16.msra.mxu0 %v878
    %1064 = vmatprep.subr.bf16.mxu0 %v886
    %1065 = vmatpush1.bf16.msra.mxu0 %v885
    %1066 = vmatprep.subr.bf16.mxu0 %v893
    %1067 = vmatpush1.bf16.msra.mxu0 %v892
    %1068 = vmatprep.subr.bf16.mxu0 %v900
    %1069 = vmatpush1.bf16.msra.mxu0 %v899
    %1070 = vmatprep.subr.bf16.mxu0 %v907
    %1071 = vmatpush1.bf16.msra.mxu0 %v906
    %1072 = vmatprep.subr.bf16.mxu0 %v914
    %1073 = vmatpush1.bf16.msra.mxu0 %v913
    %1074 = vmatprep.subr.bf16.mxu0 %v921
    %1075 = vmatpush1.bf16.msra.mxu0 %v920
    %1076 = vmatprep.subr.bf16.mxu0 %v928
    %1077 = vmatpush1.bf16.msra.mxu0 %v927
    %1078 = vmatprep.mubr.bf16.mxu0 %v304
    %1079 = vmatmul.mubr.bf16.gmra.mrb[0].mxu0 %v303
    %v1080 = vpop.f32.mrb[0].mxu0
    %v1081 = vadd.f32 %v438, %v1080
    %v1082 = vpop.f32.mrb[0].mxu0
    %v1083 = vadd.f32 %v442, %v1082
    %v1084 = vpop.f32.mrb[0].mxu0
    %v1085 = vpop.f32.mrb[0].mxu0
    %1086 = vdwg.mxu0
    %1087 = vmatprep.subr.bf16.mxu0 %v825
    %1088 = vmatpush1.bf16.msra.mxu0 %v824
    %1089 = vmatprep.subr.bf16.mxu0 %v832
    %1090 = vmatpush1.bf16.msra.mxu0 %v831
    %1091 = vmatprep.subr.bf16.mxu0 %v839
    %1092 = vmatpush1.bf16.msra.mxu0 %v838
    %1093 = vmatprep.subr.bf16.mxu0 %v846
    %1094 = vmatpush1.bf16.msra.mxu0 %v845
    %1095 = vmatprep.subr.bf16.mxu0 %v853
    %1096 = vmatpush1.bf16.msra.mxu0 %v852
    %1097 = vmatprep.subr.bf16.mxu0 %v860
    %1098 = vmatpush1.bf16.msra.mxu0 %v859
    %1099 = vmatprep.subr.bf16.mxu0 %v867
    %1100 = vmatpush1.bf16.msra.mxu0 %v866
    %1101 = vmatprep.subr.bf16.mxu0 %v874
    %1102 = vmatpush1.bf16.msra.mxu0 %v873
    %1103 = vmatprep.subr.bf16.mxu0 %v881
    %1104 = vmatpush1.bf16.msra.mxu0 %v880
    %1105 = vmatprep.subr.bf16.mxu0 %v888
    %1106 = vmatpush1.bf16.msra.mxu0 %v887
    %1107 = vmatprep.subr.bf16.mxu0 %v895
    %1108 = vmatpush1.bf16.msra.mxu0 %v894
    %1109 = vmatprep.subr.bf16.mxu0 %v902
    %1110 = vmatpush1.bf16.msra.mxu0 %v901
    %1111 = vmatprep.subr.bf16.mxu0 %v909
    %1112 = vmatpush1.bf16.msra.mxu0 %v908
    %1113 = vmatprep.subr.bf16.mxu0 %v916
    %1114 = vmatpush1.bf16.msra.mxu0 %v915
    %1115 = vmatprep.subr.bf16.mxu0 %v923
    %1116 = vmatpush1.bf16.msra.mxu0 %v922
    %1117 = vmatprep.subr.bf16.mxu0 %v930
    %1118 = vmatpush1.bf16.msra.mxu0 %v929
    %1119 = vmatprep.mubr.bf16.mxu0 %v304
    %1120 = vmatmul.mubr.bf16.gmra.mrb[0].mxu0 %v303
    %v1121 = vpop.f32.mrb[0].mxu0
    %v1122 = vadd.f32 %v446, %v1121
    %v1123 = vpop.f32.mrb[0].mxu0
    %v1124 = vadd.f32 %v450, %v1123
    %v1125 = vpop.f32.mrb[0].mxu0
    %v1126 = vpop.f32.mrb[0].mxu0
    %1127 = vdwg.mxu0
    %1128 = vmatprep.subr.bf16.mxu0 %v827
    %1129 = vmatpush1.bf16.msra.mxu0 %v826
    %1130 = vmatprep.subr.bf16.mxu0 %v834
    %1131 = vmatpush1.bf16.msra.mxu0 %v833
    %1132 = vmatprep.subr.bf16.mxu0 %v841
    %1133 = vmatpush1.bf16.msra.mxu0 %v840
    %1134 = vmatprep.subr.bf16.mxu0 %v848
    %1135 = vmatpush1.bf16.msra.mxu0 %v847
    %1136 = vmatprep.subr.bf16.mxu0 %v855
    %1137 = vmatpush1.bf16.msra.mxu0 %v854
    %1138 = vmatprep.subr.bf16.mxu0 %v862
    %1139 = vmatpush1.bf16.msra.mxu0 %v861
    %1140 = vmatprep.subr.bf16.mxu0 %v869
    %1141 = vmatpush1.bf16.msra.mxu0 %v868
    %1142 = vmatprep.subr.bf16.mxu0 %v876
    %1143 = vmatpush1.bf16.msra.mxu0 %v875
    %1144 = vmatprep.subr.bf16.mxu0 %v883
    %1145 = vmatpush1.bf16.msra.mxu0 %v882
    %1146 = vmatprep.subr.bf16.mxu0 %v890
    %1147 = vmatpush1.bf16.msra.mxu0 %v889
    %1148 = vmatprep.subr.bf16.mxu0 %v897
    %1149 = vmatpush1.bf16.msra.mxu0 %v896
    %1150 = vmatprep.subr.bf16.mxu0 %v904
    %1151 = vmatpush1.bf16.msra.mxu0 %v903
    %1152 = vmatprep.subr.bf16.mxu0 %v911
    %1153 = vmatpush1.bf16.msra.mxu0 %v910
    %1154 = vmatprep.subr.bf16.mxu0 %v918
    %1155 = vmatpush1.bf16.msra.mxu0 %v917
    %1156 = vmatprep.subr.bf16.mxu0 %v925
    %1157 = vmatpush1.bf16.msra.mxu0 %v924
    %1158 = vmatprep.subr.bf16.mxu0 %v932
    %1159 = vmatpush1.bf16.msra.mxu0 %v931
    %1160 = vmatprep.mubr.bf16.mxu0 %v304
    %1161 = vmatmul.mubr.bf16.gmra.mrb[0].mxu0 %v303
    %v1162 = vpop.f32.mrb[0].mxu0
    %v1163 = vadd.f32 %v454, %v1162
    %v1164 = vpop.f32.mrb[0].mxu0
    %v1165 = vadd.f32 %v458, %v1164
    %v1166 = vpop.f32.mrb[0].mxu0
    %v1167 = vpop.f32.mrb[0].mxu0
    %1168 = vdwg.mxu0
    %1169 = vmatprep.subr.bf16.mxu0 0
    %1170 = vmatpush1.bf16.msra.mxu0 %v828
    %1171 = vmatprep.subr.bf16.mxu0 0
    %1172 = vmatpush1.bf16.msra.mxu0 %v835
    %1173 = vmatprep.subr.bf16.mxu0 0
    %1174 = vmatpush1.bf16.msra.mxu0 %v842
    %1175 = vmatprep.subr.bf16.mxu0 0
    %1176 = vmatpush1.bf16.msra.mxu0 %v849
    %1177 = vmatprep.subr.bf16.mxu0 0
    %1178 = vmatpush1.bf16.msra.mxu0 %v856
    %1179 = vmatprep.subr.bf16.mxu0 0
    %1180 = vmatpush1.bf16.msra.mxu0 %v863
    %1181 = vmatprep.subr.bf16.mxu0 0
    %1182 = vmatpush1.bf16.msra.mxu0 %v870
    %1183 = vmatprep.subr.bf16.mxu0 0
    %1184 = vmatpush1.bf16.msra.mxu0 %v877
    %1185 = vmatprep.subr.bf16.mxu0 0
    %1186 = vmatpush1.bf16.msra.mxu0 %v884
    %1187 = vmatprep.subr.bf16.mxu0 0
    %1188 = vmatpush1.bf16.msra.mxu0 %v891
    %1189 = vmatprep.subr.bf16.mxu0 0
    %1190 = vmatpush1.bf16.msra.mxu0 %v898
    %1191 = vmatprep.subr.bf16.mxu0 0
    %1192 = vmatpush1.bf16.msra.mxu0 %v905
    %1193 = vmatprep.subr.bf16.mxu0 0
    %1194 = vmatpush1.bf16.msra.mxu0 %v912
    %1195 = vmatprep.subr.bf16.mxu0 0
    %1196 = vmatpush1.bf16.msra.mxu0 %v919
    %1197 = vmatprep.subr.bf16.mxu0 0
    %1198 = vmatpush1.bf16.msra.mxu0 %v926
    %1199 = vmatprep.subr.bf16.mxu0 0
    %1200 = vmatpush1.bf16.msra.mxu0 %v933
    %1201 = vmatprep.mubr.bf16.mxu0 %v304
    %1202 = vmatmul.mubr.bf16.gmra.mrb[0].mxu0 %v303
    %v1203 = vpop.f32.mrb[0].mxu0
    %v1204 = vadd.f32 %v462, %v1203
    %v1205 = vpop.f32.mrb[0].mxu0
    %v1206 = vpop.f32.mrb[0].mxu0
    %v1207 = vpop.f32.mrb[0].mxu0
    %1208 = vdwg.mxu0
    %1209 = vst [vmem:[#allocation10] sm:$0xff] %v1081
    %1210 = vst [vmem:[#allocation10 + $0x8] sm:$0xff] %v1083
    %1211 = vst [vmem:[#allocation10 + $0x10] sm:$0xff] %v1122
    %1212 = vst [vmem:[#allocation10 + $0x18] sm:$0xff] %v1124
    %1213 = vst [vmem:[#allocation10 + $0x20] sm:$0xff] %v1163
    %1214 = vst [vmem:[#allocation10 + $0x28] sm:$0xff] %v1165
    %1215 = vst [vmem:[#allocation10 + $0x30] sm:$0xff] %v1204
    // Predicated region
    $region46: #{tpu_custom_call.1} parent=1 // pred_check
      _
    $region47: #{tpu_custom_call.1} parent=1 // pred_check_branch
      %1217 = sbr.rel (0) target = $region49
    $region48: #{tpu_custom_call.1} parent=1 // pred_region
      %s1219 = ssub.s32 896, 896
      %1220 = vsyncadd [#allocation4], %s1219
      %s1222 = sshll.u32 [#allocation10], 4
      %s1223 = int_to_ptr.vmem [resolvable:$true] %s1222
      %1225 = dma.vmem_to_hbm [thread:$0]  %s1223, 896, %s7, [#allocation4]
    $region49: #{tpu_custom_call.1} parent=1 // pred_fallthru
      _
    // Predicated region
    $region50: #{tpu_custom_call.1} parent=1 // pred_check
      _
    $region51: #{tpu_custom_call.1} parent=1 // pred_check_branch
      %1227 = sbr.rel (0) target = $region53
    $region52: #{tpu_custom_call.1} parent=1 // pred_region
      %1228 = dma.done [#allocation4], 896
    $region53: #{tpu_custom_call.1} parent=1 // pred_fallthru
      _
    %1229 = vsyncpa [#allocation3], 1
    %1230 = vsyncpa [#allocation6], 1
    %1231 = vsyncpa [#allocation9], 1
    %1232 = vsyncpa [#allocation4], 1

</llo_original>
